<compile_context>
chip_gen: v7x
topology: tpu7x:2x2x1
jax: 0.10.0
libtpu: 0.0.40
codegen_flags: <defaults>
</compile_context>

<pallas_src>
import jax
import jax.numpy as jnp
from jax.experimental import pallas as pl
from jax.experimental.pallas import tpu as pltpu


# Lane-dense widths to try (widest first): wider last dim -> larger unmasked
# vector stores and fewer sublanes per tile for the same bytes.
_WIDTH_CANDIDATES = (4096, 2048, 1024, 512, 256, 128)


def _make_affine_kernel(scale, offset):
    # scale/offset are Python floats closed over at trace time. Weak typing
    # keeps the arithmetic in x's dtype with no extra casts.
    def kernel(x_ref, o_ref):
        o_ref[...] = x_ref[...] * scale + offset

    return kernel


def _round_up(x, m):
    return ((x + m - 1) // m) * m


def _round_down(x, m):
    return (x // m) * m


def _chip_config():
    """Per-chip tiling knobs. Dual-TC (v7x-class) chips get bigger blocks, a
    higher VMEM limit, and a lower single-block threshold so both TensorCores
    participate on mid-size inputs. Defaults (v5e/v6e) are the safe path."""
    kind = ""
    try:
        kind = jax.devices()[0].device_kind.lower()
    except Exception:  # defensive: fall back to the conservative 1-TC config
        pass
    dual_tc = ("v7" in kind) or ("7x" in kind)
    if dual_tc:
        return {
            "dual_tc": True,
            # 8 MiB blocks: at ~3.2 TB/s a block drains in ~2.6 us, so the
            # ~0.35 us fixed per-step cost is well amortized. 4x block
            # (in+out, double buffered) ~= 33 MiB < 48 MiB limit (64 MiB
            # physical VMEM per TC on v7x).
            "target_block_bytes": 8 * 1024 * 1024,
            "small_bytes": 512 * 1024,
            "vmem_limit_bytes": 48 * 1024 * 1024,
        }
    return {
        "dual_tc": False,
        # 4 MiB blocks: ~86%+ of HBM roofline for f32 elementwise on v6e.
        # 4x block = 16 MiB live VMEM, under the 32 MiB limit below (and
        # physical VMEM is 128 MiB on v5e/v6e).
        "target_block_bytes": 4 * 1024 * 1024,
        "small_bytes": 2 * 1024 * 1024,
        "vmem_limit_bytes": 32 * 1024 * 1024,
    }


def _select_tile_rows(rows, width, itemsize, sublane_mult, cfg):
    """Pick the per-block row count for the tiled (multi-block) path."""
    bytes_per_row = width * itemsize

    if not cfg["dual_tc"]:
        # Single TensorCore: biggest ~target-sized block, nothing else.
        tile = max(
            sublane_mult,
            _round_down(cfg["target_block_bytes"] // bytes_per_row, sublane_mult),
        )
        return min(tile, rows)

    # Dual-TC (v7x-class): choose an even number of near-equal blocks so the
    # ("parallel",) axis gives both TensorCores the same number of tiles.
    total_bytes = rows * bytes_per_row
    blocks_per_core = max(1, -(-total_bytes // (2 * cfg["target_block_bytes"])))
    nblocks = 2 * blocks_per_core
    base = min(
        rows,
        max(sublane_mult, _round_up(pl.cdiv(rows, nblocks), sublane_mult)),
    )
    # Prefer an even block count; search a few smaller sublane-multiples,
    # otherwise keep the base tile (never shrink blocks dramatically just to
    # chase evenness).
    tile = base
    for _ in range(4):
        if tile < sublane_mult:
            break
        if pl.cdiv(rows, tile) % 2 == 0:
            return tile
        tile -= sublane_mult
    return base


def _affine_2d(x2d, tile_rows, grid_rows, kernel, itemsize, cfg):
    """Run the streaming kernel over a lane-dense (rows, width) slab."""
    width = x2d.shape[1]
    return pl.pallas_call(
        kernel,
        out_shape=jax.ShapeDtypeStruct(x2d.shape, x2d.dtype),
        grid=(grid_rows,),
        in_specs=[pl.BlockSpec((tile_rows, width), lambda i: (i, 0))],
        out_specs=pl.BlockSpec((tile_rows, width), lambda i: (i, 0)),
        compiler_params=pltpu.CompilerParams(
            dimension_semantics=("parallel",),
            vmem_limit_bytes=cfg["vmem_limit_bytes"],
        ),
        cost_estimate=pl.CostEstimate(
            flops=2 * x2d.size,
            transcendentals=0,
            bytes_accessed=2 * x2d.size * itemsize,
        ),
    )(x2d)


def affine_layer(x, bounds):
    """Pallas implementation of AffineLayer.forward.

    x: any-shaped float array (the example model uses NCHW).
    bounds: (lo, hi) pair of static Python numbers (as in the PyTorch module).
    """
    lo = float(bounds[0])
    hi = float(bounds[1])
    scale = hi - lo          # computed in full python-float precision
    offset = lo
    kernel = _make_affine_kernel(scale, offset)

    orig_shape = x.shape
    n = x.size
    if n == 0:
        return x

    itemsize = jnp.dtype(x.dtype).itemsize
    sublane_mult = max(8, 32 // itemsize)   # 8 for f32, 16 bf16, 32 int8/fp8
    cfg = _chip_config()

    # ---- aligned path: n is a multiple of 128 ------------------------------
    width = next((w for w in _WIDTH_CANDIDATES if n % w == 0), None)
    if width is not None:
        rows = n // width
        x2d = x.reshape(rows, width)          # metadata-only reshape
        total_bytes = n * itemsize
        if total_bytes <= cfg["small_bytes"]:
            # Single full-array block (full-dim block => exempt from (8,128)).
            out2d = _affine_2d(x2d, rows, 1, kernel, itemsize, cfg)
        else:
            tile_rows = _select_tile_rows(rows, width, itemsize,
                                          sublane_mult, cfg)
            grid_rows = pl.cdiv(rows, tile_rows)
            # Ragged last block (grid_rows * tile_rows > rows) is handled by
            # Pallas: OOB reads are don't-care, OOB writes are masked.
            out2d = _affine_2d(x2d, tile_rows, grid_rows, kernel, itemsize, cfg)
        return out2d.reshape(orig_shape)

    # ---- odd path: n not a multiple of 128 ---------------------------------
    n_main = (n // 128) * 128
    if n_main == 0:
        # Tiny array (< 128 elements): one full-array block, no padding.
        x2d = x.reshape(1, n)
        out2d = pl.pallas_call(
            kernel,
            out_shape=jax.ShapeDtypeStruct(x2d.shape, x.dtype),
        )(x2d)
        return out2d.reshape(orig_shape)

    # Aligned prefix streams through the kernel; the <128-element tail is a
    # tiny jnp epilogue (avoids the old pad + slice = two extra HBM passes).
    x_flat = x.reshape(-1)
    main_out = affine_layer(x_flat[:n_main], bounds)
    tail_out = x_flat[n_main:] * scale + offset
    out_flat = jnp.concatenate([main_out, tail_out.astype(x.dtype)])
    return out_flat.reshape(orig_shape)


def _check(x, bounds):
    out = jax.block_until_ready(affine_layer(x, bounds))
    ref = (bounds[1] - bounds[0]) * x + bounds[0]
    assert out.shape == x.shape and out.dtype == x.dtype
    assert jnp.allclose(out, ref, atol=1e-6, rtol=1e-6)


if __name__ == "__main__":
    key = jax.random.PRNGKey(0)
    bounds = (-1.0, 2.0)  # deterministic "parameters" of the module

    # 1) NCHW example input at small shape (single-block fast path).
    x_small = jax.random.normal(key, (2, 4, 16, 16), dtype=jnp.float32)
    _check(x_small, bounds)

    # 2) Larger input to exercise the tiled / multi-block streaming path.
    x_big = jax.random.normal(key, (8, 8, 128, 256), dtype=jnp.float32)
    _check(x_big, bounds)

    # 3) Odd size < 128 elements (tiny full-block path, no padding).
    x_odd_small = jax.random.normal(key, (3, 5, 7), dtype=jnp.float32)
    _check(x_odd_small, bounds)

    # 4) Odd size > 128 elements (aligned prefix + jnp tail epilogue).
    x_odd_big = jax.random.normal(key, (5, 131), dtype=jnp.float32)
    _check(x_odd_big, bounds)

    print("KERNEL_OK")
</pallas_src>

<mosaic_0001>
module attributes {stable_mosaic.version = 11 : i64} {
  func.func @kernel(%arg0: i32, %arg1: memref<1x2048xf32, #tpu.memory_space<vmem>>, %arg2: memref<1x2048xf32, #tpu.memory_space<vmem>>) attributes {dimension_semantics = [#tpu.dimension_semantics<parallel>], iteration_bounds = array<i64: 1>, scalar_prefetch = 0 : i64, scratch_operands = 0 : i64, tpu.core_type = #tpu.core_type<tc>, window_params = [{transform_indices = @transform_0, window_bounds = array<i64: 1, 2048>}, {transform_indices = @transform_1, window_bounds = array<i64: 1, 2048>}]} {
    %c0 = arith.constant 0 : index
    %c0_0 = arith.constant 0 : index
    %0 = vector.load %arg1[%c0, %c0_0] : memref<1x2048xf32, #tpu.memory_space<vmem>>, vector<1x2048xf32>
    %cst = arith.constant 3.000000e+00 : f32
    %1 = vector.broadcast %cst : f32 to vector<1x2048xf32>
    %2 = arith.mulf %0, %1 : vector<1x2048xf32>
    %cst_1 = arith.constant -1.000000e+00 : f32
    %3 = vector.broadcast %cst_1 : f32 to vector<1x2048xf32>
    %4 = arith.addf %2, %3 : vector<1x2048xf32>
    %c0_2 = arith.constant 0 : index
    %c0_3 = arith.constant 0 : index
    %5 = vector.load %arg2[%c0_2, %c0_3] : memref<1x2048xf32, #tpu.memory_space<vmem>>, vector<1x2048xf32>
    tpu.vector_store %arg2[%c0_2, %c0_3], %4 {strides = array<i32>} : memref<1x2048xf32, #tpu.memory_space<vmem>>, vector<1x2048xf32>,
    return
  }
  func.func @transform_0(%arg0: i32) -> (i32, i32) {
    %c0_i32 = arith.constant 0 : i32
    %c0_i32_0 = arith.constant 0 : i32
    return %arg0, %c0_i32 : i32, i32
  }
  func.func @transform_1(%arg0: i32) -> (i32, i32) {
    %c0_i32 = arith.constant 0 : i32
    %c0_i32_0 = arith.constant 0 : i32
    return %arg0, %c0_i32 : i32, i32
  }
}

</mosaic_0001>

<llo_original>
// kernel: tpu_custom_call.1
$region0: #{tpu_custom_call.1}
  #allocation0 [shape = 'u32[]', space=smem, size = 0x4, offset = 0x4, fixed_abs, tag = 'smem constant byte address 0x4 - core index']
  #allocation1 [shape = 'u32[144,128]{1,0:T(1,128)}', space=vmem, size = 0x12000, scoped, tag = 'internal scratch']
  %s0 = inlined_call_operand.hbm [shape: f32[1,2048], index: 0, kind: input, shape index: {}]
  %s1 = inlined_call_operand.hbm [shape: f32[1,2048], index: 1, kind: output, shape index: {}]
  %s2 = sld [smem:[#allocation0]]
  $region18: #{tpu_custom_call.1} parent=0
    _
  %s4 = ssub.s32 1, %s2
  %s5 = scalar_select 0, %s4, %s2
  $region1: #{tpu_custom_call.1} parent=0
    #allocation2 [shape = 'u8[8192]{0}', space=vmem, size = 0x2000, scoped, tag = 'input window, operand 0, single buffered']
    #allocation3 [shape = 's32[1]{0}', space=sflag, size = 0x4, scoped, tag = 'scoped memory for tpu_custom_call.1']
    #allocation4 [shape = 's32[1]{0}', space=sflag, size = 0x4, scoped, tag = 'scoped memory for tpu_custom_call.1']
    #allocation5 [shape = 'u8[8192]{0}', space=vmem, size = 0x2000, scoped, tag = 'output window, operand 0, single buffered']
    %6 = vsyncpa [#allocation3], 0
    %7 = vsyncpa [#allocation4], 0
    // Predicated region
    $region2: #{tpu_custom_call.1} parent=1 // pred_check
      _
    $region3: #{tpu_custom_call.1} parent=1 // pred_check_branch
      %9 = sbr.rel (0) target = $region5
    $region4: #{tpu_custom_call.1} parent=1 // pred_region
      %s11 = ssub.s32 256, 256
      %12 = vsyncadd [#allocation3], %s11
      %s14 = sshll.u32 [#allocation2], 4
      %s15 = int_to_ptr.vmem [resolvable:$true] %s14
      %17 = dma.hbm_to_vmem [thread:$0]  %s0, 256, %s15, [#allocation3]
    $region5: #{tpu_custom_call.1} parent=1 // pred_fallthru
      _
    // Predicated region
    $region6: #{tpu_custom_call.1} parent=1 // pred_check
      _
    $region7: #{tpu_custom_call.1} parent=1 // pred_check_branch
      %19 = sbr.rel (0) target = $region9
    $region8: #{tpu_custom_call.1} parent=1 // pred_region
      %20 = dma.done [#allocation3], 256
    $region9: #{tpu_custom_call.1} parent=1 // pred_fallthru
      _
    %v21 = vld [vmem:[#allocation2] sm:$0xff]
    %v22 = vld [vmem:[#allocation2 + $0x8] sm:$0xff]
    %v23 = vmul.f32 %v21, 3.0
    %v24 = vmul.f32 %v22, 3.0
    %v25 = vadd.f32 %v23, -1.0
    %v26 = vadd.f32 %v24, -1.0
    %27 = vst [vmem:[#allocation5] sm:$0xff] %v25
    %28 = vst [vmem:[#allocation5 + $0x8] sm:$0xff] %v26
    // Predicated region
    $region10: #{tpu_custom_call.1} parent=1 // pred_check
      _
    $region11: #{tpu_custom_call.1} parent=1 // pred_check_branch
      %30 = sbr.rel (0) target = $region13
    $region12: #{tpu_custom_call.1} parent=1 // pred_region
      %s32 = ssub.s32 256, 256
      %33 = vsyncadd [#allocation4], %s32
      %s35 = sshll.u32 [#allocation5], 4
      %s36 = int_to_ptr.vmem [resolvable:$true] %s35
      %38 = dma.vmem_to_hbm [thread:$0]  %s36, 256, %s1, [#allocation4]
    $region13: #{tpu_custom_call.1} parent=1 // pred_fallthru
      _
    // Predicated region
    $region14: #{tpu_custom_call.1} parent=1 // pred_check
      _
    $region15: #{tpu_custom_call.1} parent=1 // pred_check_branch
      %40 = sbr.rel (0) target = $region17
    $region16: #{tpu_custom_call.1} parent=1 // pred_region
      %41 = dma.done [#allocation4], 256
    $region17: #{tpu_custom_call.1} parent=1 // pred_fallthru
      _
    %42 = vsyncpa [#allocation3], 1
    %43 = vsyncpa [#allocation4], 1

</llo_original>
